<compile_context>
chip_gen: v5e
topology: v5e:2x2
jax: 0.10.0
libtpu: 0.0.40
codegen_flags: <defaults>
</compile_context>

<pallas_src>
import math
import functools

import jax
import jax.numpy as jnp
from jax.experimental import pallas as pl
from jax.experimental.pallas import tpu as pltpu


# ----------------------------------------------------------------------------
# Parameter ("buffer") construction: the sinusoidal positional-encoding table,
# built exactly like the PyTorch __init__ (deterministic, no checkpoint).
# ----------------------------------------------------------------------------
def build_pe_table(max_len: int, d_model: int) -> jnp.ndarray:
    position = jnp.arange(max_len, dtype=jnp.float32)[:, None]            # (L, 1)
    div_term = jnp.exp(
        jnp.arange(0, d_model, 2, dtype=jnp.float32) * (-math.log(10000.0) / d_model)
    )                                                                     # (D/2,)
    angles = position * div_term                                          # (L, D/2)
    pe = jnp.zeros((max_len, 1, d_model), dtype=jnp.float32)
    pe = pe.at[:, 0, 0::2].set(jnp.sin(angles))
    pe = pe.at[:, 0, 1::2].set(jnp.cos(angles))
    return pe                                                             # (L, 1, D)


# ----------------------------------------------------------------------------
# Pallas kernels
# ----------------------------------------------------------------------------
def _pe_add_kernel(x_ref, pe_ref, o_ref):
    # eval mode: dropout is identity -> broadcasted add over the batch sublane.
    # x_ref: (TS, B, D), pe_ref: (TS, 1, D)
    o_ref[...] = (x_ref[...] + pe_ref[...]).astype(o_ref.dtype)


def _pe_add_dropout_kernel(x_ref, pe_ref, bits_ref, o_ref, *, keep_threshold, inv_keep):
    # training mode: inverted dropout (keep with prob 1-p, scale by 1/(1-p)).
    # bits_ref holds uniform int32 in [0, 2^31); keep iff bits < keep_threshold.
    y = x_ref[...] + pe_ref[...]
    keep = bits_ref[...] < keep_threshold
    o_ref[...] = jnp.where(keep, y * inv_keep, 0.0).astype(o_ref.dtype)


# ----------------------------------------------------------------------------
# Tiling / compiler setup
# ----------------------------------------------------------------------------
_COMPILER_PARAMS = pltpu.CompilerParams(
    dimension_semantics=("parallel",),      # shard seq tiles across TCs on v7x
    vmem_limit_bytes=32 * 1024 * 1024,      # explicit, safe on v5e/v6e/v7x
)


def _choose_seq_tile(S: int, B: int, D: int, bytes_per_elem: int,
                     vmem_budget_bytes: int = 12 * 1024 * 1024) -> int:
    """Largest seq tile whose double-buffered working set fits the budget."""
    # double-buffered x/out/(bits) tiles + double-buffered f32 pe tile, per row
    per_row = 2 * B * D * bytes_per_elem + 2 * D * 4
    ts = max(1, vmem_budget_bytes // per_row)
    return int(min(ts, S))


# ----------------------------------------------------------------------------
# Wrapper
# ----------------------------------------------------------------------------
def positional_encoding_forward(
    x: jnp.ndarray,
    pe: jnp.ndarray,
    *,
    dropout_p: float = 0.1,
    training: bool = False,
    seed: int = 0,
) -> jnp.ndarray:
    S, B, D = x.shape
    pe_slice = pe[:S].astype(x.dtype)  # (S, 1, D) == self.pe[:x.size(0)]

    if (not training) or dropout_p == 0.0:
        ts = _choose_seq_tile(S, B, D, 2 * x.dtype.itemsize)      # x tile + out tile
        return pl.pallas_call(
            _pe_add_kernel,
            out_shape=jax.ShapeDtypeStruct((S, B, D), x.dtype),
            grid=(pl.cdiv(S, ts),),
            in_specs=[
                pl.BlockSpec((ts, B, D), lambda i: (i, 0, 0)),
                pl.BlockSpec((ts, 1, D), lambda i: (i, 0, 0)),
            ],
            out_specs=pl.BlockSpec((ts, B, D), lambda i: (i, 0, 0)),
            compiler_params=_COMPILER_PARAMS,
        )(x, pe_slice)

    keep_prob = 1.0 - float(dropout_p)
    keep_threshold = min(int(round(keep_prob * float(1 << 31))), (1 << 31) - 1)

    # TODO(synk): on hardware-only builds this could use pltpu.prng_seed /
    # prng_random_bits with a per-tile seed instead of streaming bits from HBM;
    # the stateful TPU PRNG has no interpret/CPU lowering, so bits are
    # generated host-side here for portability.
    raw = jax.random.bits(jax.random.PRNGKey(seed), (S, B, D), dtype=jnp.uint32)
    rbits = (raw >> jnp.uint32(1)).astype(jnp.int32)  # uniform in [0, 2^31)

    kernel = functools.partial(
        _pe_add_dropout_kernel,
        keep_threshold=keep_threshold,
        inv_keep=1.0 / keep_prob,
    )
    ts = _choose_seq_tile(S, B, D, 2 * x.dtype.itemsize + 4)      # + int32 bits tile
    return pl.pallas_call(
        kernel,
        out_shape=jax.ShapeDtypeStruct((S, B, D), x.dtype),
        grid=(pl.cdiv(S, ts),),
        in_specs=[
            pl.BlockSpec((ts, B, D), lambda i: (i, 0, 0)),
            pl.BlockSpec((ts, 1, D), lambda i: (i, 0, 0)),
            pl.BlockSpec((ts, B, D), lambda i: (i, 0, 0)),
        ],
        out_specs=pl.BlockSpec((ts, B, D), lambda i: (i, 0, 0)),
        compiler_params=_COMPILER_PARAMS,
    )(x, pe_slice, rbits)


# ----------------------------------------------------------------------------
# Demo / self-check
# ----------------------------------------------------------------------------
if __name__ == "__main__":
    D_MODEL = 128   # module default -> lane-dense blocks
    MAX_LEN = 145
    SEQ = 8
    BATCH = 2
    DROPOUT_P = 0.1

    key = jax.random.PRNGKey(0)
    x = jax.random.normal(key, (SEQ, BATCH, D_MODEL), dtype=jnp.float32)

    pe = build_pe_table(MAX_LEN, D_MODEL)

    # eval mode (dropout == identity): exact reference check
    y_eval = positional_encoding_forward(x, pe, dropout_p=DROPOUT_P, training=False)
    y_eval = jax.block_until_ready(y_eval)
    ref = x + pe[:SEQ]  # broadcast over batch
    assert jnp.allclose(y_eval, ref, atol=1e-6, rtol=1e-6), "eval-mode mismatch"

    # training mode: exercises the dropout path; check the inverted-dropout
    # invariant (every output element is 0 or ref * 1/(1-p)).
    y_train = positional_encoding_forward(
        x, pe, dropout_p=DROPOUT_P, training=True, seed=1234
    )
    y_train = jax.block_until_ready(y_train)
    scaled = ref * (1.0 / (1.0 - DROPOUT_P))
    ok_mask = jnp.isclose(y_train, 0.0) | jnp.isclose(y_train, scaled, atol=1e-5)
    assert bool(jnp.all(ok_mask)), "training-mode dropout invariant violated"
    # sanity: keep fraction roughly 1-p
    keep_frac = float(jnp.mean((~jnp.isclose(y_train, 0.0)).astype(jnp.float32)))
    assert 0.75 < keep_frac <= 1.0, f"unexpected keep fraction {keep_frac}"

    print("KERNEL_OK")
</pallas_src>

<mosaic_0001>
module attributes {stable_mosaic.version = 11 : i64} {
  func.func @_pe_add_kernel(%arg0: i32, %arg1: memref<8x2x128xf32, #tpu.memory_space<vmem>>, %arg2: memref<8x1x128xf32, #tpu.memory_space<vmem>>, %arg3: memref<8x2x128xf32, #tpu.memory_space<vmem>>) attributes {dimension_semantics = [#tpu.dimension_semantics<parallel>], iteration_bounds = array<i64: 1>, scalar_prefetch = 0 : i64, scratch_operands = 0 : i64, tpu.core_type = #tpu.core_type<tc>, window_params = [{transform_indices = @transform_0, window_bounds = array<i64: 8, 2, 128>}, {transform_indices = @transform_1, window_bounds = array<i64: 8, 1, 128>}, {transform_indices = @transform_2, window_bounds = array<i64: 8, 2, 128>}]} {
    %c0 = arith.constant 0 : index
    %c0_0 = arith.constant 0 : index
    %c0_1 = arith.constant 0 : index
    %0 = vector.load %arg1[%c0, %c0_0, %c0_1] : memref<8x2x128xf32, #tpu.memory_space<vmem>>, vector<8x2x128xf32>
    %c0_2 = arith.constant 0 : index
    %c0_3 = arith.constant 0 : index
    %c0_4 = arith.constant 0 : index
    %1 = vector.load %arg2[%c0_2, %c0_3, %c0_4] : memref<8x1x128xf32, #tpu.memory_space<vmem>>, vector<8x1x128xf32>
    %2 = vector.broadcast %1 : vector<8x1x128xf32> to vector<8x2x128xf32>
    %3 = arith.addf %0, %2 : vector<8x2x128xf32>
    %c0_5 = arith.constant 0 : index
    %c0_6 = arith.constant 0 : index
    %c0_7 = arith.constant 0 : index
    %4 = vector.load %arg3[%c0_5, %c0_6, %c0_7] : memref<8x2x128xf32, #tpu.memory_space<vmem>>, vector<8x2x128xf32>
    tpu.vector_store %arg3[%c0_5, %c0_6, %c0_7], %3 {strides = array<i32>} : memref<8x2x128xf32, #tpu.memory_space<vmem>>, vector<8x2x128xf32>,
    return
  }
  func.func @transform_0(%arg0: i32) -> (i32, i32, i32) {
    %c0_i32 = arith.constant 0 : i32
    %c0_i32_0 = arith.constant 0 : i32
    %c0_i32_1 = arith.constant 0 : i32
    return %arg0, %c0_i32, %c0_i32_0 : i32, i32, i32
  }
  func.func @transform_1(%arg0: i32) -> (i32, i32, i32) {
    %c0_i32 = arith.constant 0 : i32
    %c0_i32_0 = arith.constant 0 : i32
    %c0_i32_1 = arith.constant 0 : i32
    return %arg0, %c0_i32, %c0_i32_0 : i32, i32, i32
  }
  func.func @transform_2(%arg0: i32) -> (i32, i32, i32) {
    %c0_i32 = arith.constant 0 : i32
    %c0_i32_0 = arith.constant 0 : i32
    %c0_i32_1 = arith.constant 0 : i32
    return %arg0, %c0_i32, %c0_i32_0 : i32, i32, i32
  }
}

</mosaic_0001>

<llo_original>
// kernel: tpu_custom_call.1
$region0: #{tpu_custom_call.1}
  #allocation0 [shape = 'u32[]', space=smem, size = 0x4, offset = 0x4, fixed_abs, tag = 'smem constant byte address 0x4 - core index']
  #allocation1 [shape = 'u32[72,128]{1,0:T(1,128)}', space=vmem, size = 0x9000, scoped, tag = 'internal scratch']
  %s0 = inlined_call_operand.hbm [shape: f32[8,2,128], index: 0, kind: input, shape index: {}]
  %s1 = inlined_call_operand.hbm [shape: f32[8,1,128], index: 1, kind: input, shape index: {}]
  %s2 = inlined_call_operand.hbm [shape: f32[8,2,128], index: 2, kind: output, shape index: {}]
  %s3 = sld [smem:[#allocation0]]
  $region26: #{tpu_custom_call.1} parent=0
    _
  %s5 = ssub.s32 1, %s3
  %s6 = scalar_select 0, %s5, %s3
  $region1: #{tpu_custom_call.1} parent=0
    #allocation2 [shape = 'u8[8192]{0}', space=vmem, size = 0x2000, scoped, tag = 'input window, operand 0, single buffered']
    #allocation3 [shape = 's32[1]{0}', space=sflag, size = 0x4, scoped, tag = 'scoped memory for tpu_custom_call.1']
    #allocation4 [shape = 's32[1]{0}', space=sflag, size = 0x4, scoped, tag = 'scoped memory for tpu_custom_call.1']
    #allocation5 [shape = 'u8[4096]{0}', space=vmem, size = 0x1000, scoped, tag = 'input window, operand 1, single buffered']
    #allocation6 [shape = 's32[1]{0}', space=sflag, size = 0x4, scoped, tag = 'scoped memory for tpu_custom_call.1']
    #allocation7 [shape = 'u8[8192]{0}', space=vmem, size = 0x2000, scoped, tag = 'output window, operand 0, single buffered']
    %7 = vsyncpa [#allocation3], 0
    %8 = vsyncpa [#allocation6], 0
    %9 = vsyncpa [#allocation4], 0
    // Predicated region
    $region2: #{tpu_custom_call.1} parent=1 // pred_check
      _
    $region3: #{tpu_custom_call.1} parent=1 // pred_check_branch
      %11 = sbr.rel (0) target = $region5
    $region4: #{tpu_custom_call.1} parent=1 // pred_region
      %13 = vsyncadd [#allocation3], 0
      %s14 = sshll.u32 %s0, 4
      %s15 = int_to_ptr.hbm [resolvable:$true] %s14
      %s16 = sshll.u32 [#allocation2], 4
      %s17 = int_to_ptr.vmem [resolvable:$true] %s16
      %22 = dma.hbm_to_vmem [thread:$0]  %s15, 256, %s17, [#allocation3], 32, 32, 2
    $region5: #{tpu_custom_call.1} parent=1 // pred_fallthru
      _
    // Predicated region
    $region6: #{tpu_custom_call.1} parent=1 // pred_check
      _
    $region7: #{tpu_custom_call.1} parent=1 // pred_check_branch
      %24 = sbr.rel (0) target = $region9
    $region8: #{tpu_custom_call.1} parent=1 // pred_region
      %26 = vsyncadd [#allocation6], 0
      %s27 = sshll.u32 %s1, 4
      %s28 = int_to_ptr.hbm [resolvable:$true] %s27
      %s29 = sshll.u32 [#allocation5], 4
      %s30 = int_to_ptr.vmem [resolvable:$true] %s29
      %35 = dma.hbm_to_vmem [thread:$0]  %s28, 128, %s30, [#allocation6], 16, 16, 1
    $region9: #{tpu_custom_call.1} parent=1 // pred_fallthru
      _
    // Predicated region
    $region10: #{tpu_custom_call.1} parent=1 // pred_check
      _
    $region11: #{tpu_custom_call.1} parent=1 // pred_check_branch
      %37 = sbr.rel (0) target = $region13
    $region12: #{tpu_custom_call.1} parent=1 // pred_region
      %39 = dma.done [#allocation3], 256
    $region13: #{tpu_custom_call.1} parent=1 // pred_fallthru
      _
    // Predicated region
    $region14: #{tpu_custom_call.1} parent=1 // pred_check
      _
    $region15: #{tpu_custom_call.1} parent=1 // pred_check_branch
      %41 = sbr.rel (0) target = $region17
    $region16: #{tpu_custom_call.1} parent=1 // pred_region
      %43 = dma.done [#allocation6], 128
    $region17: #{tpu_custom_call.1} parent=1 // pred_fallthru
      _
    %v44 = vld [vmem:[#allocation2] sm:$0x3]
    %v45 = vld [vmem:[#allocation2 + $0x2] sm:$0x3]
    %v46 = vld [vmem:[#allocation2 + $0x4] sm:$0x3]
    %v47 = vld [vmem:[#allocation2 + $0x6] sm:$0x3]
    %v48 = vld [vmem:[#allocation2 + $0x8] sm:$0x3]
    %v49 = vld [vmem:[#allocation2 + $0xa] sm:$0x3]
    %v50 = vld [vmem:[#allocation2 + $0xc] sm:$0x3]
    %v51 = vld [vmem:[#allocation2 + $0xe] sm:$0x3]
    %v52 = vld [vmem:[#allocation5] sm:$0x1]
    %v53 = vld [vmem:[#allocation5 + $0x1] sm:$0x1]
    %v54 = vld [vmem:[#allocation5 + $0x2] sm:$0x1]
    %v55 = vld [vmem:[#allocation5 + $0x3] sm:$0x1]
    %v56 = vld [vmem:[#allocation5 + $0x4] sm:$0x1]
    %v57 = vld [vmem:[#allocation5 + $0x5] sm:$0x1]
    %v58 = vld [vmem:[#allocation5 + $0x6] sm:$0x1]
    %v59 = vld [vmem:[#allocation5 + $0x7] sm:$0x1]
    %v68 = vperm.slane %v52, 0
    %v69 = vperm.slane %v53, 0
    %v70 = vperm.slane %v54, 0
    %v71 = vperm.slane %v55, 0
    %v72 = vperm.slane %v56, 0
    %v73 = vperm.slane %v57, 0
    %v74 = vperm.slane %v58, 0
    %v75 = vperm.slane %v59, 0
    %v84 = vadd.f32 %v44, %v68
    %v85 = vadd.f32 %v45, %v69
    %v86 = vadd.f32 %v46, %v70
    %v87 = vadd.f32 %v47, %v71
    %v88 = vadd.f32 %v48, %v72
    %v89 = vadd.f32 %v49, %v73
    %v90 = vadd.f32 %v50, %v74
    %v91 = vadd.f32 %v51, %v75
    %92 = vst [vmem:[#allocation7] sm:$0x3] %v84
    %93 = vst [vmem:[#allocation7 + $0x2] sm:$0x3] %v85
    %94 = vst [vmem:[#allocation7 + $0x4] sm:$0x3] %v86
    %95 = vst [vmem:[#allocation7 + $0x6] sm:$0x3] %v87
    %96 = vst [vmem:[#allocation7 + $0x8] sm:$0x3] %v88
    %97 = vst [vmem:[#allocation7 + $0xa] sm:$0x3] %v89
    %98 = vst [vmem:[#allocation7 + $0xc] sm:$0x3] %v90
    %99 = vst [vmem:[#allocation7 + $0xe] sm:$0x3] %v91
    // Predicated region
    $region18: #{tpu_custom_call.1} parent=1 // pred_check
      _
    $region19: #{tpu_custom_call.1} parent=1 // pred_check_branch
      %101 = sbr.rel (0) target = $region21
    $region20: #{tpu_custom_call.1} parent=1 // pred_region
      %103 = vsyncadd [#allocation4], 0
      %s104 = sshll.u32 [#allocation7], 4
      %s105 = int_to_ptr.vmem [resolvable:$true] %s104
      %s106 = sshll.u32 %s2, 4
      %s107 = int_to_ptr.hbm [resolvable:$true] %s106
      %112 = dma.vmem_to_hbm [thread:$0]  %s105, 256, %s107, [#allocation4], 32, 32, 2
    $region21: #{tpu_custom_call.1} parent=1 // pred_fallthru
      _
    // Predicated region
    $region22: #{tpu_custom_call.1} parent=1 // pred_check
      _
    $region23: #{tpu_custom_call.1} parent=1 // pred_check_branch
      %114 = sbr.rel (0) target = $region25
    $region24: #{tpu_custom_call.1} parent=1 // pred_region
      %116 = dma.done [#allocation4], 256
    $region25: #{tpu_custom_call.1} parent=1 // pred_fallthru
      _
    %117 = vsyncpa [#allocation3], 1
    %118 = vsyncpa [#allocation6], 1
    %119 = vsyncpa [#allocation4], 1

</llo_original>
